<compile_context>
chip_gen: v7x
topology: tpu7x:2x2x1
jax: 0.10.0
libtpu: 0.0.40
codegen_flags: <defaults>
</compile_context>

<pallas_src>
import functools

import jax
import jax.numpy as jnp
from jax.experimental import pallas as pl
from jax.experimental.pallas import tpu as pltpu


_CHUNK = 512  # in-kernel lane chunk of the row tile; bounds h1/h2 to ~4 vregs each


def _mlp3(x, w1, b1, w2, b2, w3, b3):
    """Transposed 3-layer MLP on one row chunk: x (R, F) -> (2, R)."""
    # block1: (H, F) x (R, F)^T -> (H, R); rhs-transposed MXU contraction.
    h1 = jax.lax.dot_general(
        w1, x, (((1,), (1,)), ((), ())),
        preferred_element_type=jnp.float32) + b1
    h1 = jax.nn.sigmoid(h1)                                   # (H, R), lane-dense
    # block2 / block3 are tiny-K matmuls; today they hide under the x DMA.
    # TODO(synk): if a bundle dump ever shows vmatmul/MRF drain on the critical
    # path (e.g. after enabling bf16), rewrite these two as H unrolled VPU
    # multiply-adds over the lane-dense (H, R) values, reserving the MXU for
    # layer 1.
    h2 = jnp.dot(w2, h1, preferred_element_type=jnp.float32) + b2
    h2 = jax.nn.sigmoid(h2)                                   # (H, R)
    return jnp.dot(w3, h2, preferred_element_type=jnp.float32) + b3   # (2, R)


def _linear_encode_kernel(x_ref, w1_ref, b1_ref, w2_ref, b2_ref, w3_ref, b3_ref,
                          o_ref, *, chunk, n_chunks):
    """One row-tile of the fused 3-layer MLP, computed in transposed form.

    x_ref : (TM, F)    VMEM row tile (streamed from HBM)
    w1    : (H, F)     b1 : (H, 1)      (PyTorch (out, in) weight layout)
    w2    : (H, H)     b2 : (H, 1)
    w3    : (2, H)     b3 : (2, 1)
    o_ref : (2, TM)    lane-dense transposed output block
    """
    w1 = w1_ref[...]
    b1 = b1_ref[...]
    w2 = w2_ref[...]
    b2 = b2_ref[...]
    w3 = w3_ref[...]
    b3 = b3_ref[...]

    if n_chunks == 1:
        o_ref[...] = _mlp3(x_ref[...], w1, b1, w2, b2, w3, b3).astype(o_ref.dtype)
    else:
        # Process the (large, byte-targeted) row tile in 512-row chunks so the
        # (H, chunk) intermediates stay at a handful of vregs (no spill traffic
        # on the vld/vst slots).
        @pl.loop(0, n_chunks)
        def _(c):
            r = pl.multiple_of(c * chunk, chunk)
            x = x_ref[pl.ds(r, chunk), :]                     # (chunk, F)
            out = _mlp3(x, w1, b1, w2, b2, w3, b3)            # (2, chunk)
            o_ref[:, pl.ds(r, chunk)] = out.astype(o_ref.dtype)


def _num_tensorcores():
    """Best-effort TensorCores-per-chip (2 on v7x-style parts, 1 on v5e/v6e)."""
    try:
        info = pltpu.get_tpu_info()
        for name in ("num_cores", "num_tensorcores", "tensor_cores", "core_count"):
            n = getattr(info, name, None)
            if isinstance(n, int) and n > 0:
                return n
    except Exception:
        pass
    try:
        n = getattr(jax.devices()[0], "num_cores", None)
        if isinstance(n, int) and n > 0:
            return n
    except Exception:
        pass
    return 1


def _pick_tm(M, F, *, num_cores=1, dtype_bytes=4, x_tile_bytes=4 << 20):
    """Row tile sized by BYTES (~4 MiB of x per tile), multiple of _CHUNK.

    On multi-TensorCore parts keep >= 2 grid steps per core when M allows so
    each core's pipeline can double-buffer its x DMA; on single-core parts
    (v5e/v6e) just take the maximal byte-targeted tile -- splitting only adds
    per-step overhead there.
    """
    if M <= _CHUNK:
        return M                        # single full-array block (always legal)

    def rup(v):                          # round up to a multiple of _CHUNK
        return -(-v // _CHUNK) * _CHUNK

    tm = max(_CHUNK, (x_tile_bytes // max(1, F * dtype_bytes)) // _CHUNK * _CHUNK)
    if num_cores > 1:
        min_steps = 2 * num_cores        # >= 2 pipelined steps per core
        tm = min(tm, max(_CHUNK, rup(pl.cdiv(M, min_steps))))
    return min(tm, rup(M))


def _vmem_limit_bytes(tm, F, H, in_bytes):
    """Derive the scoped-VMEM limit from actual tile sizes (portable v5e..v7x)."""
    x_tile = tm * F * in_bytes
    out_tile = 2 * tm * 4
    weights = (H * F + H * H + 2 * H) * in_bytes + (2 * H + 2) * 4
    # 2x for double-buffered pipeline buffers, plus headroom for intermediates
    # and compiler scratch.  Clamp below v7x's comfortable ceiling (~28 MiB of
    # its 64 MiB physical VMEM); the floor also covers v5e's 16 MiB default.
    total = 2 * (x_tile + out_tile + weights) + (4 << 20)
    return int(min(max(total, 16 << 20), 28 << 20))


def linear_encode_forward(x, params, *, tm=None, use_bf16=False):
    """x: (B, D, F) float32.  Returns (B, D, 2)."""
    w1, b1, w2, b2, w3, b3 = params
    B, D, F = x.shape
    H = w1.shape[0]
    M = B * D
    out_dtype = x.dtype
    x2 = x.reshape(M, F)

    if use_bf16:
        # Halves the HBM read of x (the binding resource).  Accumulation stays
        # f32 (preferred_element_type) and bias/sigmoid math stays f32.  Gate
        # on relaxing the 1e-5 reference tolerance.
        x2 = x2.astype(jnp.bfloat16)
        w1 = w1.astype(jnp.bfloat16)
        w2 = w2.astype(jnp.bfloat16)
        w3 = w3.astype(jnp.bfloat16)
    in_bytes = x2.dtype.itemsize

    if tm is None:
        tm = _pick_tm(M, F, num_cores=_num_tensorcores(), dtype_bytes=in_bytes)
    if tm > _CHUNK and tm % _CHUNK:
        tm = -(-tm // _CHUNK) * _CHUNK   # keep the in-kernel chunking exact

    chunk = tm if tm <= _CHUNK else _CHUNK
    n_chunks = 1 if tm <= _CHUNK else tm // _CHUNK

    grid = (pl.cdiv(M, tm),)             # no padding copy; edge block is masked

    kernel = functools.partial(_linear_encode_kernel, chunk=chunk, n_chunks=n_chunks)

    out_t = pl.pallas_call(
        kernel,
        out_shape=jax.ShapeDtypeStruct((2, M), out_dtype),
        grid_spec=pltpu.PrefetchScalarGridSpec(
            num_scalar_prefetch=0,
            grid=grid,
            in_specs=[
                pl.BlockSpec((tm, F), lambda i: (i, 0)),   # x row tile (streamed)
                pl.BlockSpec((H, F), lambda i: (0, 0)),    # w1 (VMEM-resident)
                pl.BlockSpec((H, 1), lambda i: (0, 0)),    # b1
                pl.BlockSpec((H, H), lambda i: (0, 0)),    # w2
                pl.BlockSpec((H, 1), lambda i: (0, 0)),    # b2
                pl.BlockSpec((2, H), lambda i: (0, 0)),    # w3
                pl.BlockSpec((2, 1), lambda i: (0, 0)),    # b3
            ],
            out_specs=pl.BlockSpec((2, tm), lambda i: (0, i)),  # lane-dense out
        ),
        compiler_params=pltpu.CompilerParams(
            dimension_semantics=("parallel",),
            vmem_limit_bytes=_vmem_limit_bytes(tm, F, H, in_bytes)),
    )(x2, w1, b1, w2, b2, w3, b3)

    return out_t.T.reshape(B, D, 2)


def init_params(key, feature_size):
    """nn.Linear default init: U(-1/sqrt(in), 1/sqrt(in)).

    Weights stored in PyTorch (out_features, in_features) layout; biases as
    (out_features, 1) for TPU-friendly 2D shapes.
    """
    H = feature_size // 8
    dims = [(feature_size, H), (H, H), (H, 2)]   # (in, out) per layer
    keys = jax.random.split(key, 2 * len(dims))
    params = []
    for idx, (fan_in, fan_out) in enumerate(dims):
        bound = 1.0 / (fan_in ** 0.5)
        w = jax.random.uniform(keys[2 * idx], (fan_out, fan_in),
                               minval=-bound, maxval=bound, dtype=jnp.float32)
        b = jax.random.uniform(keys[2 * idx + 1], (fan_out, 1),
                               minval=-bound, maxval=bound, dtype=jnp.float32)
        params += [w, b]
    return tuple(params)


def reference_forward(x, params):
    w1, b1, w2, b2, w3, b3 = params
    h1 = jax.nn.sigmoid(x @ w1.T + b1[:, 0])
    h2 = jax.nn.sigmoid(h1 @ w2.T + b2[:, 0])
    return h2 @ w3.T + b3[:, 0]


if __name__ == "__main__":
    key = jax.random.PRNGKey(0)
    k_x, k_p, k_x2 = jax.random.split(key, 3)

    batch, detector, feature_size, pred_size = 2, 16, 64, 1
    x = jax.random.normal(k_x, (batch, detector, feature_size), dtype=jnp.float32)
    params = init_params(k_p, feature_size)

    # Small shape (matches the module's batch*detector*features usage).
    fwd = jax.jit(linear_encode_forward)
    out = jax.block_until_ready(fwd(x, params))
    ref = reference_forward(x, params)
    assert out.shape == (batch, detector, 2), out.shape
    assert jnp.allclose(out, ref, atol=1e-5, rtol=1e-5), "mismatch vs reference (small)"

    # Larger shape exercising grid > 1 and the in-kernel 512-row chunk loop.
    xb = jax.random.normal(k_x2, (8, 256, feature_size), dtype=jnp.float32)
    fwd_big = jax.jit(lambda xx, pp: linear_encode_forward(xx, pp, tm=1024))
    out_b = jax.block_until_ready(fwd_big(xb, params))
    ref_b = reference_forward(xb, params)
    assert out_b.shape == (8, 256, 2), out_b.shape
    assert jnp.allclose(out_b, ref_b, atol=1e-5, rtol=1e-5), "mismatch vs reference (big)"

    print("KERNEL_OK")
</pallas_src>

<mosaic_0001>
module attributes {stable_mosaic.version = 11 : i64} {
  func.func @_linear_encode_kernel(%arg0: i32, %arg1: memref<32x64xf32, #tpu.memory_space<vmem>>, %arg2: memref<8x64xf32, #tpu.memory_space<vmem>>, %arg3: memref<8x1xf32, #tpu.memory_space<vmem>>, %arg4: memref<8x8xf32, #tpu.memory_space<vmem>>, %arg5: memref<8x1xf32, #tpu.memory_space<vmem>>, %arg6: memref<2x8xf32, #tpu.memory_space<vmem>>, %arg7: memref<2x1xf32, #tpu.memory_space<vmem>>, %arg8: memref<2x32xf32, #tpu.memory_space<vmem>>) attributes {dimension_semantics = [#tpu.dimension_semantics<parallel>], iteration_bounds = array<i64: 1>, scalar_prefetch = 0 : i64, scratch_operands = 0 : i64, tpu.core_type = #tpu.core_type<tc>, window_params = [{transform_indices = @transform_0, window_bounds = array<i64: 32, 64>}, {pipeline_mode = #tpu.pipeline_mode<synchronous>, transform_indices = @transform_1, window_bounds = array<i64: 8, 64>}, {pipeline_mode = #tpu.pipeline_mode<synchronous>, transform_indices = @transform_2, window_bounds = array<i64: 8, 1>}, {pipeline_mode = #tpu.pipeline_mode<synchronous>, transform_indices = @transform_3, window_bounds = array<i64: 8, 8>}, {pipeline_mode = #tpu.pipeline_mode<synchronous>, transform_indices = @transform_4, window_bounds = array<i64: 8, 1>}, {pipeline_mode = #tpu.pipeline_mode<synchronous>, transform_indices = @transform_5, window_bounds = array<i64: 2, 8>}, {pipeline_mode = #tpu.pipeline_mode<synchronous>, transform_indices = @transform_6, window_bounds = array<i64: 2, 1>}, {transform_indices = @transform_7, window_bounds = array<i64: 2, 32>}]} {
    %c0 = arith.constant 0 : index
    %c0_0 = arith.constant 0 : index
    %0 = vector.load %arg2[%c0, %c0_0] : memref<8x64xf32, #tpu.memory_space<vmem>>, vector<8x64xf32>
    %c0_1 = arith.constant 0 : index
    %c0_2 = arith.constant 0 : index
    %1 = vector.load %arg3[%c0_1, %c0_2] : memref<8x1xf32, #tpu.memory_space<vmem>>, vector<8x1xf32>
    %c0_3 = arith.constant 0 : index
    %c0_4 = arith.constant 0 : index
    %2 = vector.load %arg4[%c0_3, %c0_4] : memref<8x8xf32, #tpu.memory_space<vmem>>, vector<8x8xf32>
    %c0_5 = arith.constant 0 : index
    %c0_6 = arith.constant 0 : index
    %3 = vector.load %arg5[%c0_5, %c0_6] : memref<8x1xf32, #tpu.memory_space<vmem>>, vector<8x1xf32>
    %c0_7 = arith.constant 0 : index
    %c0_8 = arith.constant 0 : index
    %4 = vector.load %arg6[%c0_7, %c0_8] : memref<2x8xf32, #tpu.memory_space<vmem>>, vector<2x8xf32>
    %c0_9 = arith.constant 0 : index
    %c0_10 = arith.constant 0 : index
    %5 = vector.load %arg7[%c0_9, %c0_10] : memref<2x1xf32, #tpu.memory_space<vmem>>, vector<2x1xf32>
    %c0_11 = arith.constant 0 : index
    %c0_12 = arith.constant 0 : index
    %6 = vector.load %arg1[%c0_11, %c0_12] : memref<32x64xf32, #tpu.memory_space<vmem>>, vector<32x64xf32>
    %cst = arith.constant dense<0.000000e+00> : vector<8x32xf32>
    %7 = tpu.matmul %0, %6, %cst {dimension_numbers = #tpu.dot_dimension_numbers<[1], [1], [0], [0], [0, 0, 1, 0], [], []>} : vector<8x64xf32>, vector<32x64xf32>, vector<8x32xf32> -> vector<8x32xf32>
    %8 = vector.broadcast %1 : vector<8x1xf32> to vector<8x32xf32>
    %9 = arith.addf %7, %8 : vector<8x32xf32>
    %10 = arith.negf %9 : vector<8x32xf32>
    %11 = math.exp %10 : vector<8x32xf32>
    %cst_13 = arith.constant 1.000000e+00 : f32
    %12 = vector.broadcast %cst_13 : f32 to vector<8x32xf32>
    %13 = arith.addf %12, %11 : vector<8x32xf32>
    %14 = arith.divf %12, %13 : vector<8x32xf32>
    %cst_14 = arith.constant dense<0.000000e+00> : vector<8x32xf32>
    %15 = tpu.matmul %2, %14, %cst_14 {dimension_numbers = #tpu.dot_dimension_numbers<[1], [0], [0], [1], [0, 0, 1, 1], [], []>} : vector<8x8xf32>, vector<8x32xf32>, vector<8x32xf32> -> vector<8x32xf32>
    %16 = vector.broadcast %3 : vector<8x1xf32> to vector<8x32xf32>
    %17 = arith.addf %15, %16 : vector<8x32xf32>
    %18 = arith.negf %17 : vector<8x32xf32>
    %19 = math.exp %18 : vector<8x32xf32>
    %cst_15 = arith.constant 1.000000e+00 : f32
    %20 = vector.broadcast %cst_15 : f32 to vector<8x32xf32>
    %21 = arith.addf %20, %19 : vector<8x32xf32>
    %22 = arith.divf %20, %21 : vector<8x32xf32>
    %cst_16 = arith.constant dense<0.000000e+00> : vector<2x32xf32>
    %23 = tpu.matmul %4, %22, %cst_16 {dimension_numbers = #tpu.dot_dimension_numbers<[1], [0], [0], [1], [0, 0, 1, 1], [], []>} : vector<2x8xf32>, vector<8x32xf32>, vector<2x32xf32> -> vector<2x32xf32>
    %24 = vector.broadcast %5 : vector<2x1xf32> to vector<2x32xf32>
    %25 = arith.addf %23, %24 : vector<2x32xf32>
    %c0_17 = arith.constant 0 : index
    %c0_18 = arith.constant 0 : index
    %26 = vector.load %arg8[%c0_17, %c0_18] : memref<2x32xf32, #tpu.memory_space<vmem>>, vector<2x32xf32>
    tpu.vector_store %arg8[%c0_17, %c0_18], %25 {strides = array<i32>} : memref<2x32xf32, #tpu.memory_space<vmem>>, vector<2x32xf32>,
    return
  }
  func.func @transform_0(%arg0: i32) -> (i32, i32) {
    %c0_i32 = arith.constant 0 : i32
    %c0_i32_0 = arith.constant 0 : i32
    return %arg0, %c0_i32 : i32, i32
  }
  func.func @transform_1(%arg0: i32) -> (i32, i32) {
    %c0_i32 = arith.constant 0 : i32
    %c0_i32_0 = arith.constant 0 : i32
    %c0_i32_1 = arith.constant 0 : i32
    return %c0_i32, %c0_i32_0 : i32, i32
  }
  func.func @transform_2(%arg0: i32) -> (i32, i32) {
    %c0_i32 = arith.constant 0 : i32
    %c0_i32_0 = arith.constant 0 : i32
    %c0_i32_1 = arith.constant 0 : i32
    return %c0_i32, %c0_i32_0 : i32, i32
  }
  func.func @transform_3(%arg0: i32) -> (i32, i32) {
    %c0_i32 = arith.constant 0 : i32
    %c0_i32_0 = arith.constant 0 : i32
    %c0_i32_1 = arith.constant 0 : i32
    return %c0_i32, %c0_i32_0 : i32, i32
  }
  func.func @transform_4(%arg0: i32) -> (i32, i32) {
    %c0_i32 = arith.constant 0 : i32
    %c0_i32_0 = arith.constant 0 : i32
    %c0_i32_1 = arith.constant 0 : i32
    return %c0_i32, %c0_i32_0 : i32, i32
  }
  func.func @transform_5(%arg0: i32) -> (i32, i32) {
    %c0_i32 = arith.constant 0 : i32
    %c0_i32_0 = arith.constant 0 : i32
    %c0_i32_1 = arith.constant 0 : i32
    return %c0_i32, %c0_i32_0 : i32, i32
  }
  func.func @transform_6(%arg0: i32) -> (i32, i32) {
    %c0_i32 = arith.constant 0 : i32
    %c0_i32_0 = arith.constant 0 : i32
    %c0_i32_1 = arith.constant 0 : i32
    return %c0_i32, %c0_i32_0 : i32, i32
  }
  func.func @transform_7(%arg0: i32) -> (i32, i32) {
    %c0_i32 = arith.constant 0 : i32
    %c0_i32_0 = arith.constant 0 : i32
    return %c0_i32, %arg0 : i32, i32
  }
}

</mosaic_0001>

<llo_original>
// kernel: linear_encode_forward.1
$region0: #{linear_encode_forward.1}
  #allocation0 [shape = 'u32[]', space=smem, size = 0x4, offset = 0x4, fixed_abs, tag = 'smem constant byte address 0x4 - core index']
  #allocation1 [shape = 'u32[144,128]{1,0:T(1,128)}', space=vmem, size = 0x12000, scoped, tag = 'internal scratch']
  %s0 = inlined_call_operand.hbm [shape: f32[32,64], index: 0, kind: input, shape index: {}]
  %s1 = inlined_call_operand.vmem [shape: f32[8,64], index: 1, kind: input, shape index: {}]
  %s2 = inlined_call_operand.vmem [shape: f32[8,1], index: 2, kind: input, shape index: {}]
  %s3 = inlined_call_operand.vmem [shape: f32[8,8], index: 3, kind: input, shape index: {}]
  %s4 = inlined_call_operand.vmem [shape: f32[8,1], index: 4, kind: input, shape index: {}]
  %s5 = inlined_call_operand.vmem [shape: f32[2,8], index: 5, kind: input, shape index: {}]
  %s6 = inlined_call_operand.vmem [shape: f32[2,1], index: 6, kind: input, shape index: {}]
  %s7 = inlined_call_operand.vmem [shape: f32[2,32], index: 7, kind: output, shape index: {}]
  %s8 = sld [smem:[#allocation0]]
  $region42: #{linear_encode_forward.1} parent=0
    _
  %s10 = ssub.s32 1, %s8
  %s11 = scalar_select 0, %s10, %s8
  $region1: #{linear_encode_forward.1} parent=0
    #allocation2 [shape = 'u8[16384]{0}', space=vmem, size = 0x4000, scoped, tag = 'input window, operand 0, single buffered']
    #allocation3 [shape = 's32[1]{0}', space=sflag, size = 0x4, scoped, tag = 'scoped memory for linear_encode_forward.1']
    %12 = vsyncpa [#allocation3], 0
    // Predicated region
    $region2: #{linear_encode_forward.1} parent=1 // pred_check
      _
    $region3: #{linear_encode_forward.1} parent=1 // pred_check_branch
      %14 = sbr.rel (0) target = $region5
    $region4: #{linear_encode_forward.1} parent=1 // pred_region
      %s16 = ssub.s32 512, 512
      %17 = vsyncadd [#allocation3], %s16
      %s18 = sshll.u32 [#allocation2], 4
      %s19 = int_to_ptr.vmem [resolvable:$true] %s18
      %24 = dma.hbm_to_vmem [thread:$0]  %s0, 512, %s19, [#allocation3], 128, 128, 8
    $region5: #{linear_encode_forward.1} parent=1 // pred_fallthru
      _
    // Predicated region
    $region6: #{linear_encode_forward.1} parent=1 // pred_check
      _
    $region7: #{linear_encode_forward.1} parent=1 // pred_check_branch
      %26 = sbr.rel (0) target = $region9
    $region8: #{linear_encode_forward.1} parent=1 // pred_region
      _
    $region9: #{linear_encode_forward.1} parent=1 // pred_fallthru
      _
    // Predicated region
    $region10: #{linear_encode_forward.1} parent=1 // pred_check
      _
    $region11: #{linear_encode_forward.1} parent=1 // pred_check_branch
      %28 = sbr.rel (0) target = $region13
    $region12: #{linear_encode_forward.1} parent=1 // pred_region
      _
    $region13: #{linear_encode_forward.1} parent=1 // pred_fallthru
      _
    // Predicated region
    $region14: #{linear_encode_forward.1} parent=1 // pred_check
      _
    $region15: #{linear_encode_forward.1} parent=1 // pred_check_branch
      %30 = sbr.rel (0) target = $region17
    $region16: #{linear_encode_forward.1} parent=1 // pred_region
      _
    $region17: #{linear_encode_forward.1} parent=1 // pred_fallthru
      _
    // Predicated region
    $region18: #{linear_encode_forward.1} parent=1 // pred_check
      _
    $region19: #{linear_encode_forward.1} parent=1 // pred_check_branch
      %32 = sbr.rel (0) target = $region21
    $region20: #{linear_encode_forward.1} parent=1 // pred_region
      _
    $region21: #{linear_encode_forward.1} parent=1 // pred_fallthru
      _
    // Predicated region
    $region22: #{linear_encode_forward.1} parent=1 // pred_check
      _
    $region23: #{linear_encode_forward.1} parent=1 // pred_check_branch
      %34 = sbr.rel (0) target = $region25
    $region24: #{linear_encode_forward.1} parent=1 // pred_region
      _
    $region25: #{linear_encode_forward.1} parent=1 // pred_fallthru
      _
    // Predicated region
    $region26: #{linear_encode_forward.1} parent=1 // pred_check
      _
    $region27: #{linear_encode_forward.1} parent=1 // pred_check_branch
      %36 = sbr.rel (0) target = $region29
    $region28: #{linear_encode_forward.1} parent=1 // pred_region
      _
    $region29: #{linear_encode_forward.1} parent=1 // pred_fallthru
      _
    // Predicated region
    $region30: #{linear_encode_forward.1} parent=1 // pred_check
      _
    $region31: #{linear_encode_forward.1} parent=1 // pred_check_branch
      %38 = sbr.rel (0) target = $region33
    $region32: #{linear_encode_forward.1} parent=1 // pred_region
      %39 = dma.done [#allocation3], 512
    $region33: #{linear_encode_forward.1} parent=1 // pred_fallthru
      _
    %v40 = vld [vmem:[%s1] sm:$0xff]
    %v41 = vld [vmem:[%s2] sm:$0xff]
    %v42 = vld [vmem:[%s3] sm:$0xff]
    %v43 = vld [vmem:[%s4] sm:$0xff]
    %v44 = vld [vmem:[%s5] sm:$0x3]
    %v45 = vld [vmem:[%s6] sm:$0x3]
    %v46 = vld [vmem:[#allocation2] sm:$0xff]
    %v47 = vld [vmem:[#allocation2 + $0x8] sm:$0xff]
    %v48 = vld [vmem:[#allocation2 + $0x10] sm:$0xff]
    %v49 = vld [vmem:[#allocation2 + $0x18] sm:$0xff]
    %51 = vset.pattern.permute.xlu0 0
    %52 = vperm.xlu0 %51, %v41
    %v53 = vpop.permute.xlu0 %52
    %vm55 = vcmask 523264
    %v57 = vsel %vm55, %v40, 0
    %v60 = vsel %vm55, %v46, 0
    %v63 = vsel %vm55, %v47, 0
    %v66 = vsel %vm55, %v48, 0
    %v69 = vsel %vm55, %v49, 0
    %71 = vmatprep.subr.mxu0 0.0
    %72 = vmatpush1.xpose.msra.mxu0 %v60
    %73 = vmatprep.subr.mxu0 0.0
    %74 = vmatpush1.xpose.msra.mxu0 %v63
    %75 = vmatprep.subr.mxu0 0.0
    %76 = vmatpush1.xpose.msra.mxu0 %v66
    %77 = vmatprep.subr.mxu0 0.0
    %78 = vmatpush1.xpose.msra.mxu0 %v69
    %79 = vmatprep.subr.mxu0 0.0
    %80 = vmatpush1.xpose.msra.mxu0 0.0
    %81 = vmatprep.subr.mxu0 0.0
    %82 = vmatpush1.xpose.msra.mxu0 0.0
    %83 = vmatprep.subr.mxu0 0.0
    %84 = vmatpush1.xpose.msra.mxu0 0.0
    %85 = vmatprep.subr.mxu0 0.0
    %86 = vmatpush1.xpose.msra.mxu0 0.0
    %87 = vmatprep.subr.mxu0 0.0
    %88 = vmatpush1.xpose.msra.mxu0 0.0
    %89 = vmatprep.subr.mxu0 0.0
    %90 = vmatpush1.xpose.msra.mxu0 0.0
    %91 = vmatprep.subr.mxu0 0.0
    %92 = vmatpush1.xpose.msra.mxu0 0.0
    %93 = vmatprep.subr.mxu0 0.0
    %94 = vmatpush1.xpose.msra.mxu0 0.0
    %95 = vmatprep.subr.mxu0 0.0
    %96 = vmatpush1.xpose.msra.mxu0 0.0
    %97 = vmatprep.subr.mxu0 0.0
    %98 = vmatpush1.xpose.msra.mxu0 0.0
    %99 = vmatprep.subr.mxu0 0.0
    %100 = vmatpush1.xpose.msra.mxu0 0.0
    %101 = vmatprep.subr.mxu0 0.0
    %102 = vmatpush1.xpose.msra.mxu0 0.0
    %103 = vmatprep.subr.mxu0 0.0
    %104 = vmatpush1.xpose.msra.mxu0 0.0
    %105 = vmatprep.subr.mxu0 0.0
    %106 = vmatpush1.xpose.msra.mxu0 0.0
    %107 = vmatprep.subr.mxu0 0.0
    %108 = vmatpush1.xpose.msra.mxu0 0.0
    %109 = vmatprep.subr.mxu0 0.0
    %110 = vmatpush1.xpose.msra.mxu0 0.0
    %111 = vmatprep.subr.mxu0 0.0
    %112 = vmatpush1.xpose.msra.mxu0 0.0
    %113 = vmatprep.subr.mxu0 0.0
    %114 = vmatpush1.xpose.msra.mxu0 0.0
    %115 = vmatprep.subr.mxu0 0.0
    %116 = vmatpush1.xpose.msra.mxu0 0.0
    %117 = vmatprep.subr.mxu0 0.0
    %118 = vmatpush1.xpose.msra.mxu0 0.0
    %119 = vmatprep.subr.mxu0 0.0
    %120 = vmatpush1.xpose.msra.mxu0 0.0
    %121 = vmatprep.subr.mxu0 0.0
    %122 = vmatpush1.xpose.msra.mxu0 0.0
    %123 = vmatprep.subr.mxu0 0.0
    %124 = vmatpush1.xpose.msra.mxu0 0.0
    %125 = vmatprep.subr.mxu0 0.0
    %126 = vmatpush1.xpose.msra.mxu0 0.0
    %127 = vmatprep.subr.mxu0 0.0
    %128 = vmatpush1.xpose.msra.mxu0 0.0
    %129 = vmatprep.subr.mxu0 0.0
    %130 = vmatpush1.xpose.msra.mxu0 0.0
    %131 = vmatprep.subr.mxu0 0.0
    %132 = vmatpush1.xpose.msra.mxu0 0.0
    %133 = vmatprep.subr.mxu0 0.0
    %134 = vmatpush1.xpose.msra.mxu0 0.0
    %135 = vmatprep.mubr.f32.mxu0 0.0
    %136 = vmatmul.mubr.f32.gmra.mrb[0].mxu0 %v57
    %v137 = vpop.f32.mrb[0].mxu0
    %v138 = vadd.f32 %v53, %v137
    %v139 = vpop.f32.mrb[0].mxu0
    %140 = vdwg.mxu0
    %v141 = vxor.u32 %v138, 2147483648
    %v142 = vmul.f32 %v141, 1.442695
    %v143 = vpow.pop %v142
    %v144 = vadd.f32 %v143, 1.0
    %v145 = vrcp.pop %v144
    %v146 = vmul.f32 1.0, %v145
    %148 = vset.pattern.permute.xlu0 0
    %149 = vperm.xlu0 %148, %v43
    %v150 = vpop.permute.xlu0 %149
    %vm152 = vcmask 64512
    %v154 = vsel %vm152, %v42, 0
    %156 = vmatprep.subr.mxu0 0.0
    %157 = vmatpush1.msra.mxu0 %v146
    %158 = vmatprep.subr.mxu0 0.0
    %159 = vmatpush1.msra.mxu0 0.0
    %160 = vmatprep.subr.mxu0 0.0
    %161 = vmatpush1.msra.mxu0 0.0
    %162 = vmatprep.subr.mxu0 0.0
    %163 = vmatpush1.msra.mxu0 0.0
    %164 = vmatprep.subr.mxu0 0.0
    %165 = vmatpush1.msra.mxu0 0.0
    %166 = vmatprep.subr.mxu0 0.0
    %167 = vmatpush1.msra.mxu0 0.0
    %168 = vmatprep.subr.mxu0 0.0
    %169 = vmatpush1.msra.mxu0 0.0
    %170 = vmatprep.subr.mxu0 0.0
    %171 = vmatpush1.msra.mxu0 0.0
    %172 = vmatprep.subr.mxu0 0.0
    %173 = vmatpush1.msra.mxu0 0.0
    %174 = vmatprep.subr.mxu0 0.0
    %175 = vmatpush1.msra.mxu0 0.0
    %176 = vmatprep.subr.mxu0 0.0
    %177 = vmatpush1.msra.mxu0 0.0
    %178 = vmatprep.subr.mxu0 0.0
    %179 = vmatpush1.msra.mxu0 0.0
    %180 = vmatprep.subr.mxu0 0.0
    %181 = vmatpush1.msra.mxu0 0.0
    %182 = vmatprep.subr.mxu0 0.0
    %183 = vmatpush1.msra.mxu0 0.0
    %184 = vmatprep.subr.mxu0 0.0
    %185 = vmatpush1.msra.mxu0 0.0
    %186 = vmatprep.subr.mxu0 0.0
    %187 = vmatpush1.msra.mxu0 0.0
    %188 = vmatprep.subr.mxu0 0.0
    %189 = vmatpush1.msra.mxu0 0.0
    %190 = vmatprep.subr.mxu0 0.0
    %191 = vmatpush1.msra.mxu0 0.0
    %192 = vmatprep.subr.mxu0 0.0
    %193 = vmatpush1.msra.mxu0 0.0
    %194 = vmatprep.subr.mxu0 0.0
    %195 = vmatpush1.msra.mxu0 0.0
    %196 = vmatprep.subr.mxu0 0.0
    %197 = vmatpush1.msra.mxu0 0.0
    %198 = vmatprep.subr.mxu0 0.0
    %199 = vmatpush1.msra.mxu0 0.0
    %200 = vmatprep.subr.mxu0 0.0
    %201 = vmatpush1.msra.mxu0 0.0
    %202 = vmatprep.subr.mxu0 0.0
    %203 = vmatpush1.msra.mxu0 0.0
    %204 = vmatprep.subr.mxu0 0.0
    %205 = vmatpush1.msra.mxu0 0.0
    %206 = vmatprep.subr.mxu0 0.0
    %207 = vmatpush1.msra.mxu0 0.0
    %208 = vmatprep.subr.mxu0 0.0
    %209 = vmatpush1.msra.mxu0 0.0
    %210 = vmatprep.subr.mxu0 0.0
    %211 = vmatpush1.msra.mxu0 0.0
    %212 = vmatprep.subr.mxu0 0.0
    %213 = vmatpush1.msra.mxu0 0.0
    %214 = vmatprep.subr.mxu0 0.0
    %215 = vmatpush1.msra.mxu0 0.0
    %216 = vmatprep.subr.mxu0 0.0
    %217 = vmatpush1.msra.mxu0 0.0
    %218 = vmatprep.subr.mxu0 0.0
    %219 = vmatpush1.msra.mxu0 0.0
    %220 = vmatprep.mubr.f32.mxu0 0.0
    %221 = vmatmul.mubr.f32.gmra.mrb[0].mxu0 %v154
    %v222 = vpop.f32.mrb[0].mxu0
    %v223 = vadd.f32 %v150, %v222
    %v224 = vpop.f32.mrb[0].mxu0
    %225 = vdwg.mxu0
    %v226 = vxor.u32 %v223, 2147483648
    %v227 = vmul.f32 %v226, 1.442695
    %v228 = vpow.pop %v227
    %v229 = vadd.f32 %v228, 1.0
    %v230 = vrcp.pop %v229
    %v231 = vmul.f32 1.0, %v230
    %233 = vset.pattern.permute.xlu0 0
    %234 = vperm.xlu0 %233, %v45
    %v235 = vpop.permute.xlu0 %234
    %v238 = vsel %vm152, %v44, 0
    %240 = vmatprep.subr.mxu0 0.0
    %241 = vmatpush1.msra.mxu0 %v231
    %242 = vmatprep.subr.mxu0 0.0
    %243 = vmatpush1.msra.mxu0 0.0
    %244 = vmatprep.subr.mxu0 0.0
    %245 = vmatpush1.msra.mxu0 0.0
    %246 = vmatprep.subr.mxu0 0.0
    %247 = vmatpush1.msra.mxu0 0.0
    %248 = vmatprep.subr.mxu0 0.0
    %249 = vmatpush1.msra.mxu0 0.0
    %250 = vmatprep.subr.mxu0 0.0
    %251 = vmatpush1.msra.mxu0 0.0
    %252 = vmatprep.subr.mxu0 0.0
    %253 = vmatpush1.msra.mxu0 0.0
    %254 = vmatprep.subr.mxu0 0.0
    %255 = vmatpush1.msra.mxu0 0.0
    %256 = vmatprep.subr.mxu0 0.0
    %257 = vmatpush1.msra.mxu0 0.0
    %258 = vmatprep.subr.mxu0 0.0
    %259 = vmatpush1.msra.mxu0 0.0
    %260 = vmatprep.subr.mxu0 0.0
    %261 = vmatpush1.msra.mxu0 0.0
    %262 = vmatprep.subr.mxu0 0.0
    %263 = vmatpush1.msra.mxu0 0.0
    %264 = vmatprep.subr.mxu0 0.0
    %265 = vmatpush1.msra.mxu0 0.0
    %266 = vmatprep.subr.mxu0 0.0
    %267 = vmatpush1.msra.mxu0 0.0
    %268 = vmatprep.subr.mxu0 0.0
    %269 = vmatpush1.msra.mxu0 0.0
    %270 = vmatprep.subr.mxu0 0.0
    %271 = vmatpush1.msra.mxu0 0.0
    %272 = vmatprep.subr.mxu0 0.0
    %273 = vmatpush1.msra.mxu0 0.0
    %274 = vmatprep.subr.mxu0 0.0
    %275 = vmatpush1.msra.mxu0 0.0
    %276 = vmatprep.subr.mxu0 0.0
    %277 = vmatpush1.msra.mxu0 0.0
    %278 = vmatprep.subr.mxu0 0.0
    %279 = vmatpush1.msra.mxu0 0.0
    %280 = vmatprep.subr.mxu0 0.0
    %281 = vmatpush1.msra.mxu0 0.0
    %282 = vmatprep.subr.mxu0 0.0
    %283 = vmatpush1.msra.mxu0 0.0
    %284 = vmatprep.subr.mxu0 0.0
    %285 = vmatpush1.msra.mxu0 0.0
    %286 = vmatprep.subr.mxu0 0.0
    %287 = vmatpush1.msra.mxu0 0.0
    %288 = vmatprep.subr.mxu0 0.0
    %289 = vmatpush1.msra.mxu0 0.0
    %290 = vmatprep.subr.mxu0 0.0
    %291 = vmatpush1.msra.mxu0 0.0
    %292 = vmatprep.subr.mxu0 0.0
    %293 = vmatpush1.msra.mxu0 0.0
    %294 = vmatprep.subr.mxu0 0.0
    %295 = vmatpush1.msra.mxu0 0.0
    %296 = vmatprep.subr.mxu0 0.0
    %297 = vmatpush1.msra.mxu0 0.0
    %298 = vmatprep.subr.mxu0 0.0
    %299 = vmatpush1.msra.mxu0 0.0
    %300 = vmatprep.subr.mxu0 0.0
    %301 = vmatpush1.msra.mxu0 0.0
    %302 = vmatprep.subr.mxu0 0.0
    %303 = vmatpush1.msra.mxu0 0.0
    %304 = vmatprep.mubr.f32.mxu0 0.0
    %305 = vmatmul.mubr.f32.gmra.mrb[0].mxu0 %v238
    %v306 = vpop.f32.mrb[0].mxu0
    %v307 = vadd.f32 %v235, %v306
    %v308 = vpop.f32.mrb[0].mxu0
    %309 = vdwg.mxu0
    %vm310 = vcmask 254976
    %311 = vst.msk [vmem:[%s7] sm:$0x3] %vm310, %v307
    // Predicated region
    $region34: #{linear_encode_forward.1} parent=1 // pred_check
      _
    $region35: #{linear_encode_forward.1} parent=1 // pred_check_branch
      %313 = sbr.rel (0) target = $region37
    $region36: #{linear_encode_forward.1} parent=1 // pred_region
      _
    $region37: #{linear_encode_forward.1} parent=1 // pred_fallthru
      _
    // Predicated region
    $region38: #{linear_encode_forward.1} parent=1 // pred_check
      _
    $region39: #{linear_encode_forward.1} parent=1 // pred_check_branch
      %315 = sbr.rel (0) target = $region41
    $region40: #{linear_encode_forward.1} parent=1 // pred_region
      _
    $region41: #{linear_encode_forward.1} parent=1 // pred_fallthru
      _
    %316 = vsyncpa [#allocation3], 1

</llo_original>
